<compile_context>
chip_gen: v7x
topology: tpu7x:2x2x1
jax: 0.10.0
libtpu: 0.0.40
codegen_flags: <defaults>
</compile_context>

<pallas_src>
import functools

import jax
import jax.numpy as jnp
from jax.experimental import pallas as pl
from jax.experimental.pallas import tpu as pltpu


def _skip_conv_kernel(x_ref, w_ref, o_ref, *, W, use_bf16_matmul):
    # x_ref: (1, Cin, HW + 2*(W+1))  flat-halo input, one image
    # w_ref: (9, Cout, Cin)          conv weight, tap-major (kh*3 + kw)
    # o_ref: (1, Cin+Cout, HW)       [x ; ConvLayer(x)] channel concat
    cin = x_ref.shape[1]
    ctot = o_ref.shape[1]
    cout = ctot - cin
    hw = o_ref.shape[2]
    base = W + 1

    # Column masks for the row-wrap of the flattened W axis.  Vertical
    # out-of-image taps read halo zeros, so only dw = +/-1 needs masking.
    col = jax.lax.broadcasted_iota(jnp.int32, (1, hw), 1) % W
    not_first_col = col != 0           # valid positions for dw == -1
    not_last_col = col != (W - 1)      # valid positions for dw == +1

    # Center tap == unshifted x; reused for the fused skip copy below.
    x_center = x_ref[0, :, pl.ds(base, hw)]                       # (Cin, HW)

    # 3x3 conv as 9 shifted-tap matmuls, f32 accumulation.  The conv bias is
    # omitted: it cancels exactly under InstanceNorm(affine=False).
    acc = jnp.zeros((cout, hw), jnp.float32)
    for t in range(9):
        dh, dw = t // 3 - 1, t % 3 - 1
        if dh == 0 and dw == 0:
            x_tap = x_center
        else:
            x_tap = x_ref[0, :, pl.ds(base + dh * W + dw, hw)]    # (Cin, HW)
        if dw == -1:
            x_tap = jnp.where(not_first_col, x_tap, 0.0)
        elif dw == 1:
            x_tap = jnp.where(not_last_col, x_tap, 0.0)
        w_tap = w_ref[t]                                          # (Cout, Cin)
        if use_bf16_matmul:
            x_tap = x_tap.astype(jnp.bfloat16)
            w_tap = w_tap.astype(jnp.bfloat16)
        acc = acc + jnp.dot(w_tap, x_tap,
                            preferred_element_type=jnp.float32)  # (Cout, HW)

    # InstanceNorm2d (affine=False, eps=1e-5, biased variance): two-pass in
    # f32 over the lane (spatial) axis — avoids the E[x^2]-E[x]^2 cancellation
    # flagged in review.
    inv_hw = 1.0 / hw
    mean = jnp.sum(acc, axis=-1, keepdims=True) * inv_hw
    centered = acc - mean
    var = jnp.sum(centered * centered, axis=-1, keepdims=True) * inv_hw
    yn = centered * jax.lax.rsqrt(var + 1e-5)

    # ReLU; Dropout(p=0) is the identity.
    yr = jnp.maximum(yn, 0.0)

    # Fused SkipConnection concat along channels: [x ; y].  At production
    # channel counts (Cin a multiple of the 8-row f32 sublane tile) both
    # stores are sublane-aligned and unmasked; at the Cin=4 test size the y
    # store starts at sublane 4 (masked store), negligible at this Cout*HW.
    # TODO(synk): pad Cin to a multiple of 8 at the kernel boundary if
    # unaligned channel counts ever appear at production sizes.
    o_ref[0, :cin, :] = x_center.astype(o_ref.dtype)
    o_ref[0, cin:, :] = yr.astype(o_ref.dtype)


def skip_connection_forward(x, weight, *, use_bf16_matmul=False):
    """SkipConnection(ConvLayer) forward.

    x:      (N, Cin, H, W) float32, NCHW (PyTorch convention)
    weight: (Cout, Cin, 3, 3)   (conv bias is a mathematical no-op before
            InstanceNorm(affine=False), so the kernel does not need it)
    returns (N, Cin+Cout, H, W) = concat([x, ConvLayer(x)], dim=1)
    """
    N, Cin, H, W = x.shape
    Cout = weight.shape[0]
    HW = H * W
    halo = W + 1
    HWP = HW + 2 * halo

    # Flat 1-pixel halo: supplies the conv's zero padding for the vertical
    # (and corner) taps with a single cheap pad pass (~1.1x the x bytes).
    x_pad = jnp.pad(x.reshape(N, Cin, HW), ((0, 0), (0, 0), (halo, halo)))

    # Tap-major weight: w_taps[kh*3 + kw] = weight[:, :, kh, kw].
    w_taps = jnp.transpose(weight, (2, 3, 0, 1)).reshape(9, Cout, Cin)
    if use_bf16_matmul:
        # Halves the weight operand and uses the native bf16 MXU on v6e/v7x.
        # Kept off by default: it would exceed the 1e-4 f32 reference check.
        w_taps = w_taps.astype(jnp.bfloat16)

    kernel = functools.partial(_skip_conv_kernel, W=W,
                               use_bf16_matmul=use_bf16_matmul)

    # TODO(synk): for production sizes, tile HW with a trailing "arbitrary"
    # grid axis + VMEM scratch for the InstanceNorm partial sums (>=512 lanes
    # per step), and re-derive tile sizes against v7x's 64 MiB VMEM.
    out = pl.pallas_call(
        kernel,
        out_shape=jax.ShapeDtypeStruct((N, Cin + Cout, HW), jnp.float32),
        grid_spec=pltpu.PrefetchScalarGridSpec(
            num_scalar_prefetch=0,
            grid=(N,),
            in_specs=[
                pl.BlockSpec((1, Cin, HWP), lambda n: (n, 0, 0)),
                pl.BlockSpec((9, Cout, Cin), lambda n: (0, 0, 0)),
            ],
            out_specs=pl.BlockSpec((1, Cin + Cout, HW), lambda n: (n, 0, 0)),
        ),
        compiler_params=pltpu.CompilerParams(
            # N >= 2 parallel steps keep both v7x TensorCores busy.
            dimension_semantics=("parallel",),
            # Explicit, generous cap (per-step working set here is ~50 KB).
            vmem_limit_bytes=16 * 1024 * 1024,
        ),
    )(x_pad, w_taps)

    # (N, Cin+Cout, HW) is already channel-major -> straight reshape to NCHW.
    return out.reshape(N, Cin + Cout, H, W)


def reference_forward(x, weight, bias):
    # Pure-JAX reference: conv(+bias) -> instance norm -> relu -> concat skip.
    y = jax.lax.conv_general_dilated(
        x, weight, window_strides=(1, 1), padding=((1, 1), (1, 1)),
        dimension_numbers=("NCHW", "OIHW", "NCHW"))
    y = y + bias.reshape(1, -1, 1, 1)
    mean = jnp.mean(y, axis=(2, 3), keepdims=True)
    var = jnp.mean((y - mean) ** 2, axis=(2, 3), keepdims=True)
    yn = (y - mean) * jax.lax.rsqrt(var + 1e-5)
    return jnp.concatenate([x, jnp.maximum(yn, 0.0)], axis=1)


if __name__ == "__main__":
    key = jax.random.PRNGKey(0)
    kx, kw, kb = jax.random.split(key, 3)

    N, Cin, H, W = 2, 4, 16, 16
    Cout = 8

    x = jax.random.normal(kx, (N, Cin, H, W), dtype=jnp.float32)
    # Deterministic parameter init (Kaiming-uniform-ish scale, like nn.Conv2d).
    fan_in = Cin * 3 * 3
    bound = 1.0 / (fan_in ** 0.5)
    weight = jax.random.uniform(kw, (Cout, Cin, 3, 3), jnp.float32, -bound, bound)
    bias = jax.random.uniform(kb, (Cout,), jnp.float32, -bound, bound)

    out = skip_connection_forward(x, weight)
    out = jax.block_until_ready(out)

    # Reference keeps the conv bias; the kernel drops it because a per-channel
    # constant cancels exactly under InstanceNorm(affine=False).
    ref = reference_forward(x, weight, bias)
    assert out.shape == (N, Cin + Cout, H, W)
    err = float(jnp.max(jnp.abs(out - ref)))
    assert err < 1e-4, f"mismatch vs reference: {err}"

    print("KERNEL_OK")
</pallas_src>

<mosaic_0001>
module attributes {stable_mosaic.version = 11 : i64} {
  func.func @_skip_conv_kernel(%arg0: i32, %arg1: memref<1x4x290xf32, #tpu.memory_space<vmem>>, %arg2: memref<9x8x4xf32, #tpu.memory_space<vmem>>, %arg3: memref<1x12x256xf32, #tpu.memory_space<vmem>>) attributes {dimension_semantics = [#tpu.dimension_semantics<parallel>], iteration_bounds = array<i64: 2>, scalar_prefetch = 0 : i64, scratch_operands = 0 : i64, tpu.core_type = #tpu.core_type<tc>, window_params = [{transform_indices = @transform_0, window_bounds = array<i64: 1, 4, 290>}, {pipeline_mode = #tpu.pipeline_mode<synchronous>, transform_indices = @transform_1, window_bounds = array<i64: 9, 8, 4>}, {transform_indices = @transform_2, window_bounds = array<i64: 1, 12, 256>}]} {
    %0 = tpu.iota {dimensions = array<i32: 1>} : vector<1x256xi32>
    %c16_i32 = arith.constant 16 : i32
    %c0_i32 = arith.constant 0 : i32
    %1 = arith.cmpi eq, %c16_i32, %c0_i32 : i32
    %c1_i32 = arith.constant 1 : i32
    %2 = arith.select %1, %c1_i32, %c16_i32 : i32
    %3 = vector.broadcast %2 : i32 to vector<1x256xi32>
    %4 = arith.remsi %0, %3 : vector<1x256xi32>
    %c0_i32_0 = arith.constant 0 : i32
    %5 = vector.broadcast %c0_i32_0 : i32 to vector<1x256xi32>
    %6 = arith.cmpi ne, %4, %5 : vector<1x256xi32>
    %c0_i32_1 = arith.constant 0 : i32
    %7 = vector.broadcast %c0_i32_1 : i32 to vector<1x256xi32>
    %8 = arith.cmpi slt, %4, %7 : vector<1x256xi32>
    %c0_i32_2 = arith.constant 0 : i32
    %9 = arith.cmpi slt, %2, %c0_i32_2 : i32
    %10 = vector.broadcast %9 : i1 to vector<1x256xi1>
    %11 = vector.broadcast %10 : vector<1x256xi1> to vector<1x256xi1>
    %12 = arith.xori %8, %11 : vector<1x256xi1>
    %13 = arith.andi %12, %6 : vector<1x256xi1>
    %14 = vector.broadcast %2 : i32 to vector<1x256xi32>
    %15 = arith.addi %4, %14 : vector<1x256xi32>
    %16 = arith.select %13, %15, %4 : vector<1x256xi1>, vector<1x256xi32>
    %c0_i32_3 = arith.constant 0 : i32
    %17 = vector.broadcast %c0_i32_3 : i32 to vector<1x256xi32>
    %18 = arith.cmpi ne, %16, %17 : vector<1x256xi32>
    %c15_i32 = arith.constant 15 : i32
    %19 = vector.broadcast %c15_i32 : i32 to vector<1x256xi32>
    %20 = arith.cmpi ne, %16, %19 : vector<1x256xi32>
    %c0 = arith.constant 0 : index
    %c0_4 = arith.constant 0 : index
    %c17 = arith.constant 17 : index
    %21 = vector.load %arg1[%c0, %c0_4, %c17] : memref<1x4x290xf32, #tpu.memory_space<vmem>>, vector<1x4x256xf32>
    %22 = vector.shape_cast %21 : vector<1x4x256xf32> to vector<4x256xf32>
    %cst = arith.constant 0.000000e+00 : f32
    %23 = vector.broadcast %cst : f32 to vector<8x256xf32>
    %c0_5 = arith.constant 0 : index
    %c0_6 = arith.constant 0 : index
    %c0_7 = arith.constant 0 : index
    %24 = vector.load %arg1[%c0_5, %c0_6, %c0_7] : memref<1x4x290xf32, #tpu.memory_space<vmem>>, vector<1x4x256xf32>
    %25 = vector.shape_cast %24 : vector<1x4x256xf32> to vector<4x256xf32>
    %cst_8 = arith.constant 0.000000e+00 : f32
    %26 = vector.shape_cast %18 : vector<1x256xi1> to vector<1x256xi1>
    %27 = vector.broadcast %26 : vector<1x256xi1> to vector<4x256xi1>
    %28 = vector.broadcast %cst_8 : f32 to vector<4x256xf32>
    %29 = arith.select %27, %25, %28 : vector<4x256xi1>, vector<4x256xf32>
    %c0_9 = arith.constant 0 : index
    %c0_10 = arith.constant 0 : index
    %c0_11 = arith.constant 0 : index
    %30 = vector.load %arg2[%c0_9, %c0_10, %c0_11] : memref<9x8x4xf32, #tpu.memory_space<vmem>>, vector<1x8x4xf32>
    %31 = vector.shape_cast %30 : vector<1x8x4xf32> to vector<8x4xf32>
    %cst_12 = arith.constant dense<0.000000e+00> : vector<8x256xf32>
    %32 = tpu.matmul %31, %29, %cst_12 {dimension_numbers = #tpu.dot_dimension_numbers<[1], [0], [0], [1], [0, 0, 1, 1], [], []>} : vector<8x4xf32>, vector<4x256xf32>, vector<8x256xf32> -> vector<8x256xf32>
    %33 = arith.addf %23, %32 : vector<8x256xf32>
    %c0_13 = arith.constant 0 : index
    %c0_14 = arith.constant 0 : index
    %c1 = arith.constant 1 : index
    %34 = vector.load %arg1[%c0_13, %c0_14, %c1] : memref<1x4x290xf32, #tpu.memory_space<vmem>>, vector<1x4x256xf32>
    %35 = vector.shape_cast %34 : vector<1x4x256xf32> to vector<4x256xf32>
    %c1_15 = arith.constant 1 : index
    %c0_16 = arith.constant 0 : index
    %c0_17 = arith.constant 0 : index
    %36 = vector.load %arg2[%c1_15, %c0_16, %c0_17] : memref<9x8x4xf32, #tpu.memory_space<vmem>>, vector<1x8x4xf32>
    %37 = vector.shape_cast %36 : vector<1x8x4xf32> to vector<8x4xf32>
    %cst_18 = arith.constant dense<0.000000e+00> : vector<8x256xf32>
    %38 = tpu.matmul %37, %35, %cst_18 {dimension_numbers = #tpu.dot_dimension_numbers<[1], [0], [0], [1], [0, 0, 1, 1], [], []>} : vector<8x4xf32>, vector<4x256xf32>, vector<8x256xf32> -> vector<8x256xf32>
    %39 = arith.addf %33, %38 : vector<8x256xf32>
    %c0_19 = arith.constant 0 : index
    %c0_20 = arith.constant 0 : index
    %c2 = arith.constant 2 : index
    %40 = vector.load %arg1[%c0_19, %c0_20, %c2] : memref<1x4x290xf32, #tpu.memory_space<vmem>>, vector<1x4x256xf32>
    %41 = vector.shape_cast %40 : vector<1x4x256xf32> to vector<4x256xf32>
    %cst_21 = arith.constant 0.000000e+00 : f32
    %42 = vector.shape_cast %20 : vector<1x256xi1> to vector<1x256xi1>
    %43 = vector.broadcast %42 : vector<1x256xi1> to vector<4x256xi1>
    %44 = vector.broadcast %cst_21 : f32 to vector<4x256xf32>
    %45 = arith.select %43, %41, %44 : vector<4x256xi1>, vector<4x256xf32>
    %c2_22 = arith.constant 2 : index
    %c0_23 = arith.constant 0 : index
    %c0_24 = arith.constant 0 : index
    %46 = vector.load %arg2[%c2_22, %c0_23, %c0_24] : memref<9x8x4xf32, #tpu.memory_space<vmem>>, vector<1x8x4xf32>
    %47 = vector.shape_cast %46 : vector<1x8x4xf32> to vector<8x4xf32>
    %cst_25 = arith.constant dense<0.000000e+00> : vector<8x256xf32>
    %48 = tpu.matmul %47, %45, %cst_25 {dimension_numbers = #tpu.dot_dimension_numbers<[1], [0], [0], [1], [0, 0, 1, 1], [], []>} : vector<8x4xf32>, vector<4x256xf32>, vector<8x256xf32> -> vector<8x256xf32>
    %49 = arith.addf %39, %48 : vector<8x256xf32>
    %c0_26 = arith.constant 0 : index
    %c0_27 = arith.constant 0 : index
    %c16 = arith.constant 16 : index
    %50 = vector.load %arg1[%c0_26, %c0_27, %c16] : memref<1x4x290xf32, #tpu.memory_space<vmem>>, vector<1x4x256xf32>
    %51 = vector.shape_cast %50 : vector<1x4x256xf32> to vector<4x256xf32>
    %cst_28 = arith.constant 0.000000e+00 : f32
    %52 = vector.shape_cast %18 : vector<1x256xi1> to vector<1x256xi1>
    %53 = vector.broadcast %52 : vector<1x256xi1> to vector<4x256xi1>
    %54 = vector.broadcast %cst_28 : f32 to vector<4x256xf32>
    %55 = arith.select %53, %51, %54 : vector<4x256xi1>, vector<4x256xf32>
    %c3 = arith.constant 3 : index
    %c0_29 = arith.constant 0 : index
    %c0_30 = arith.constant 0 : index
    %56 = vector.load %arg2[%c3, %c0_29, %c0_30] : memref<9x8x4xf32, #tpu.memory_space<vmem>>, vector<1x8x4xf32>
    %57 = vector.shape_cast %56 : vector<1x8x4xf32> to vector<8x4xf32>
    %cst_31 = arith.constant dense<0.000000e+00> : vector<8x256xf32>
    %58 = tpu.matmul %57, %55, %cst_31 {dimension_numbers = #tpu.dot_dimension_numbers<[1], [0], [0], [1], [0, 0, 1, 1], [], []>} : vector<8x4xf32>, vector<4x256xf32>, vector<8x256xf32> -> vector<8x256xf32>
    %59 = arith.addf %49, %58 : vector<8x256xf32>
    %c4 = arith.constant 4 : index
    %c0_32 = arith.constant 0 : index
    %c0_33 = arith.constant 0 : index
    %60 = vector.load %arg2[%c4, %c0_32, %c0_33] : memref<9x8x4xf32, #tpu.memory_space<vmem>>, vector<1x8x4xf32>
    %61 = vector.shape_cast %60 : vector<1x8x4xf32> to vector<8x4xf32>
    %cst_34 = arith.constant dense<0.000000e+00> : vector<8x256xf32>
    %62 = tpu.matmul %61, %22, %cst_34 {dimension_numbers = #tpu.dot_dimension_numbers<[1], [0], [0], [1], [0, 0, 1, 1], [], []>} : vector<8x4xf32>, vector<4x256xf32>, vector<8x256xf32> -> vector<8x256xf32>
    %63 = arith.addf %59, %62 : vector<8x256xf32>
    %c0_35 = arith.constant 0 : index
    %c0_36 = arith.constant 0 : index
    %c18 = arith.constant 18 : index
    %64 = vector.load %arg1[%c0_35, %c0_36, %c18] : memref<1x4x290xf32, #tpu.memory_space<vmem>>, vector<1x4x256xf32>
    %65 = vector.shape_cast %64 : vector<1x4x256xf32> to vector<4x256xf32>
    %cst_37 = arith.constant 0.000000e+00 : f32
    %66 = vector.shape_cast %20 : vector<1x256xi1> to vector<1x256xi1>
    %67 = vector.broadcast %66 : vector<1x256xi1> to vector<4x256xi1>
    %68 = vector.broadcast %cst_37 : f32 to vector<4x256xf32>
    %69 = arith.select %67, %65, %68 : vector<4x256xi1>, vector<4x256xf32>
    %c5 = arith.constant 5 : index
    %c0_38 = arith.constant 0 : index
    %c0_39 = arith.constant 0 : index
    %70 = vector.load %arg2[%c5, %c0_38, %c0_39] : memref<9x8x4xf32, #tpu.memory_space<vmem>>, vector<1x8x4xf32>
    %71 = vector.shape_cast %70 : vector<1x8x4xf32> to vector<8x4xf32>
    %cst_40 = arith.constant dense<0.000000e+00> : vector<8x256xf32>
    %72 = tpu.matmul %71, %69, %cst_40 {dimension_numbers = #tpu.dot_dimension_numbers<[1], [0], [0], [1], [0, 0, 1, 1], [], []>} : vector<8x4xf32>, vector<4x256xf32>, vector<8x256xf32> -> vector<8x256xf32>
    %73 = arith.addf %63, %72 : vector<8x256xf32>
    %c0_41 = arith.constant 0 : index
    %c0_42 = arith.constant 0 : index
    %c32 = arith.constant 32 : index
    %74 = vector.load %arg1[%c0_41, %c0_42, %c32] : memref<1x4x290xf32, #tpu.memory_space<vmem>>, vector<1x4x256xf32>
    %75 = vector.shape_cast %74 : vector<1x4x256xf32> to vector<4x256xf32>
    %cst_43 = arith.constant 0.000000e+00 : f32
    %76 = vector.shape_cast %18 : vector<1x256xi1> to vector<1x256xi1>
    %77 = vector.broadcast %76 : vector<1x256xi1> to vector<4x256xi1>
    %78 = vector.broadcast %cst_43 : f32 to vector<4x256xf32>
    %79 = arith.select %77, %75, %78 : vector<4x256xi1>, vector<4x256xf32>
    %c6 = arith.constant 6 : index
    %c0_44 = arith.constant 0 : index
    %c0_45 = arith.constant 0 : index
    %80 = vector.load %arg2[%c6, %c0_44, %c0_45] : memref<9x8x4xf32, #tpu.memory_space<vmem>>, vector<1x8x4xf32>
    %81 = vector.shape_cast %80 : vector<1x8x4xf32> to vector<8x4xf32>
    %cst_46 = arith.constant dense<0.000000e+00> : vector<8x256xf32>
    %82 = tpu.matmul %81, %79, %cst_46 {dimension_numbers = #tpu.dot_dimension_numbers<[1], [0], [0], [1], [0, 0, 1, 1], [], []>} : vector<8x4xf32>, vector<4x256xf32>, vector<8x256xf32> -> vector<8x256xf32>
    %83 = arith.addf %73, %82 : vector<8x256xf32>
    %c0_47 = arith.constant 0 : index
    %c0_48 = arith.constant 0 : index
    %c33 = arith.constant 33 : index
    %84 = vector.load %arg1[%c0_47, %c0_48, %c33] : memref<1x4x290xf32, #tpu.memory_space<vmem>>, vector<1x4x256xf32>
    %85 = vector.shape_cast %84 : vector<1x4x256xf32> to vector<4x256xf32>
    %c7 = arith.constant 7 : index
    %c0_49 = arith.constant 0 : index
    %c0_50 = arith.constant 0 : index
    %86 = vector.load %arg2[%c7, %c0_49, %c0_50] : memref<9x8x4xf32, #tpu.memory_space<vmem>>, vector<1x8x4xf32>
    %87 = vector.shape_cast %86 : vector<1x8x4xf32> to vector<8x4xf32>
    %cst_51 = arith.constant dense<0.000000e+00> : vector<8x256xf32>
    %88 = tpu.matmul %87, %85, %cst_51 {dimension_numbers = #tpu.dot_dimension_numbers<[1], [0], [0], [1], [0, 0, 1, 1], [], []>} : vector<8x4xf32>, vector<4x256xf32>, vector<8x256xf32> -> vector<8x256xf32>
    %89 = arith.addf %83, %88 : vector<8x256xf32>
    %c0_52 = arith.constant 0 : index
    %c0_53 = arith.constant 0 : index
    %c34 = arith.constant 34 : index
    %90 = vector.load %arg1[%c0_52, %c0_53, %c34] : memref<1x4x290xf32, #tpu.memory_space<vmem>>, vector<1x4x256xf32>
    %91 = vector.shape_cast %90 : vector<1x4x256xf32> to vector<4x256xf32>
    %cst_54 = arith.constant 0.000000e+00 : f32
    %92 = vector.shape_cast %20 : vector<1x256xi1> to vector<1x256xi1>
    %93 = vector.broadcast %92 : vector<1x256xi1> to vector<4x256xi1>
    %94 = vector.broadcast %cst_54 : f32 to vector<4x256xf32>
    %95 = arith.select %93, %91, %94 : vector<4x256xi1>, vector<4x256xf32>
    %c8 = arith.constant 8 : index
    %c0_55 = arith.constant 0 : index
    %c0_56 = arith.constant 0 : index
    %96 = vector.load %arg2[%c8, %c0_55, %c0_56] : memref<9x8x4xf32, #tpu.memory_space<vmem>>, vector<1x8x4xf32>
    %97 = vector.shape_cast %96 : vector<1x8x4xf32> to vector<8x4xf32>
    %cst_57 = arith.constant dense<0.000000e+00> : vector<8x256xf32>
    %98 = tpu.matmul %97, %95, %cst_57 {dimension_numbers = #tpu.dot_dimension_numbers<[1], [0], [0], [1], [0, 0, 1, 1], [], []>} : vector<8x4xf32>, vector<4x256xf32>, vector<8x256xf32> -> vector<8x256xf32>
    %99 = arith.addf %89, %98 : vector<8x256xf32>
    %cst_58 = arith.constant dense<0.000000e+00> : vector<8xf32>
    %100 = vector.multi_reduction <add>, %99, %cst_58 [1] : vector<8x256xf32> to vector<8xf32>
    %101 = vector.shape_cast %100 : vector<8xf32> to vector<8x1xf32>
    %cst_59 = arith.constant 3.906250e-03 : f32
    %102 = vector.broadcast %cst_59 : f32 to vector<8x1xf32>
    %103 = arith.mulf %101, %102 : vector<8x1xf32>
    %104 = vector.broadcast %103 : vector<8x1xf32> to vector<8x256xf32>
    %105 = arith.subf %99, %104 : vector<8x256xf32>
    %106 = arith.mulf %105, %105 : vector<8x256xf32>
    %cst_60 = arith.constant dense<0.000000e+00> : vector<8xf32>
    %107 = vector.multi_reduction <add>, %106, %cst_60 [1] : vector<8x256xf32> to vector<8xf32>
    %108 = vector.shape_cast %107 : vector<8xf32> to vector<8x1xf32>
    %cst_61 = arith.constant 3.906250e-03 : f32
    %109 = vector.broadcast %cst_61 : f32 to vector<8x1xf32>
    %110 = arith.mulf %108, %109 : vector<8x1xf32>
    %cst_62 = arith.constant 9.99999974E-6 : f32
    %111 = vector.broadcast %cst_62 : f32 to vector<8x1xf32>
    %112 = arith.addf %110, %111 : vector<8x1xf32>
    %113 = math.rsqrt %112 : vector<8x1xf32>
    %114 = vector.broadcast %113 : vector<8x1xf32> to vector<8x256xf32>
    %115 = arith.mulf %105, %114 : vector<8x256xf32>
    %cst_63 = arith.constant 0.000000e+00 : f32
    %116 = vector.broadcast %cst_63 : f32 to vector<8x256xf32>
    %117 = arith.maximumf %115, %116 : vector<8x256xf32>
    %c0_64 = arith.constant 0 : index
    %c0_65 = arith.constant 0 : index
    %c0_66 = arith.constant 0 : index
    %118 = vector.load %arg3[%c0_64, %c0_65, %c0_66] : memref<1x12x256xf32, #tpu.memory_space<vmem>>, vector<1x4x256xf32>
    %119 = vector.shape_cast %118 : vector<1x4x256xf32> to vector<4x256xf32>
    %120 = vector.shape_cast %22 : vector<4x256xf32> to vector<1x4x256xf32>
    tpu.vector_store %arg3[%c0_64, %c0_65, %c0_66], %120 {strides = array<i32>} : memref<1x12x256xf32, #tpu.memory_space<vmem>>, vector<1x4x256xf32>,
    %c0_67 = arith.constant 0 : index
    %c4_68 = arith.constant 4 : index
    %c0_69 = arith.constant 0 : index
    %121 = vector.load %arg3[%c0_67, %c4_68, %c0_69] : memref<1x12x256xf32, #tpu.memory_space<vmem>>, vector<1x8x256xf32>
    %122 = vector.shape_cast %121 : vector<1x8x256xf32> to vector<8x256xf32>
    %123 = vector.shape_cast %117 : vector<8x256xf32> to vector<1x8x256xf32>
    tpu.vector_store %arg3[%c0_67, %c4_68, %c0_69], %123 {strides = array<i32>} : memref<1x12x256xf32, #tpu.memory_space<vmem>>, vector<1x8x256xf32>,
    return
  }
  func.func @transform_0(%arg0: i32) -> (i32, i32, i32) {
    %c0_i32 = arith.constant 0 : i32
    %c0_i32_0 = arith.constant 0 : i32
    %c0_i32_1 = arith.constant 0 : i32
    return %arg0, %c0_i32, %c0_i32_0 : i32, i32, i32
  }
  func.func @transform_1(%arg0: i32) -> (i32, i32, i32) {
    %c0_i32 = arith.constant 0 : i32
    %c0_i32_0 = arith.constant 0 : i32
    %c0_i32_1 = arith.constant 0 : i32
    %c0_i32_2 = arith.constant 0 : i32
    return %c0_i32, %c0_i32_0, %c0_i32_1 : i32, i32, i32
  }
  func.func @transform_2(%arg0: i32) -> (i32, i32, i32) {
    %c0_i32 = arith.constant 0 : i32
    %c0_i32_0 = arith.constant 0 : i32
    %c0_i32_1 = arith.constant 0 : i32
    return %arg0, %c0_i32, %c0_i32_0 : i32, i32, i32
  }
}

</mosaic_0001>

<llo_original>
// kernel: tpu_custom_call.1
$region0: #{tpu_custom_call.1}
  #allocation0 [shape = 'u32[]', space=smem, size = 0x4, offset = 0x4, fixed_abs, tag = 'smem constant byte address 0x4 - core index']
  #allocation1 [shape = 'u32[144,128]{1,0:T(1,128)}', space=vmem, size = 0x12000, scoped, tag = 'internal scratch']
  %s0 = inlined_call_operand.vmem [shape: f32[2,4,290], index: 0, kind: input, shape index: {}]
  %s1 = inlined_call_operand.vmem [shape: f32[9,8,4], index: 1, kind: input, shape index: {}]
  %s2 = inlined_call_operand.vmem [shape: f32[2,12,256], index: 2, kind: output, shape index: {}]
  %s3 = sld [smem:[#allocation0]]
  $region41: #{tpu_custom_call.1} parent=0
    _
  %s5 = ssub.s32 1, %s3
  %s6 = scalar_select 0, %s5, %s3
  loop: start=0, step=1, limit=4
  $region2: #{tpu_custom_call.1} parent=0 // loop_pre_header
    _
  $region3: #{tpu_custom_call.1} parent=0 // loop_header
    %s8 = sphi 0, %s12
    %p9 = scmp.ge.s32.totalorder %s8, 4
    %s18 = sphi 0, %s20
    %s21 = sphi 0, %s18
    %s22 = sphi 0, %s21
    %s38 = sphi 0, %s22
    %s42 = sphi 0, %s42
    %s44 = sphi 0, %s42
    %s45 = sphi 0, %s44
    %s59 = sphi 0, %s45
    %s65 = sphi 0, %s67
    %s68 = sphi 0, %s65
    %s69 = sphi 0, %s68
    %s85 = sphi 0, %s69
  $region4: #{tpu_custom_call.1} parent=0 // loop_header_branch
    %11 = sbr.rel (%p9) target = $region8
  $region5: #{tpu_custom_call.1} parent=0 // loop_body
    %s13 = ssub.s32 %s8, 1
    %s14 = ssub.s32 %s8, 2
    %s15 = sadd.s32 %s8, 1
    %s16 = ssub.s32 %s8, %s15
    %p17 = scmp.eq.s32.totalorder %s16, 0
    %s19 = sadd.s32 %s18, 1
    %s20 = scalar_select %p17, %s18, %s19
    %p23 = pneg %p17
    %p24 = scmp.eq.s32.totalorder %s8, 1
    %p25 = por %p23, %p24
    %p26 = scmp.ne.s32.totalorder %s18, %s21
    %p27 = scmp.eq.s32.totalorder %s8, 0
    %p28 = por %p26, %p27
    %p29 = scmp.ne.s32.totalorder %s18, %s21
    %p30 = scmp.eq.s32.totalorder %s13, 1
    %p31 = por %p29, %p30
    %p32 = scmp.ne.s32.totalorder %s21, %s22
    %p33 = scmp.eq.s32.totalorder %s13, 0
    %p34 = por %p32, %p33
    %p35 = scmp.ne.s32.totalorder %s21, %s22
    %p36 = scmp.eq.s32.totalorder %s14, 1
    %p37 = por %p35, %p36
    %p39 = scmp.ne.s32.totalorder %s22, %s38
    %p40 = scmp.eq.s32.totalorder %s14, 0
    %p41 = por %p39, %p40
    %s43 = sadd.s32 %s42, 1
    %p46 = scmp.eq.s32.totalorder %s8, 1
    %p47 = scmp.ne.s32.totalorder %s42, %s44
    %p48 = scmp.eq.s32.totalorder %s8, 0
    %p49 = por %p47, %p48
    %p50 = scmp.ne.s32.totalorder %s42, %s44
    %p51 = scmp.eq.s32.totalorder %s13, 1
    %p52 = por %p50, %p51
    %p53 = scmp.ne.s32.totalorder %s44, %s45
    %p54 = scmp.eq.s32.totalorder %s13, 0
    %p55 = por %p53, %p54
    %p56 = scmp.ne.s32.totalorder %s44, %s45
    %p57 = scmp.eq.s32.totalorder %s14, 1
    %p58 = por %p56, %p57
    %p60 = scmp.ne.s32.totalorder %s45, %s59
    %p61 = scmp.eq.s32.totalorder %s14, 0
    %p62 = por %p60, %p61
    %s63 = ssub.s32 %s8, %s15
    %p64 = scmp.eq.s32.totalorder %s63, 0
    %s66 = sadd.s32 %s65, 1
    %s67 = scalar_select %p64, %s65, %s66
    %p70 = pneg %p64
    %p71 = scmp.eq.s32.totalorder %s8, 1
    %p72 = por %p70, %p71
    %p73 = scmp.ne.s32.totalorder %s65, %s68
    %p74 = scmp.eq.s32.totalorder %s8, 0
    %p75 = por %p73, %p74
    %p76 = scmp.ne.s32.totalorder %s65, %s68
    %p77 = scmp.eq.s32.totalorder %s13, 1
    %p78 = por %p76, %p77
    %p79 = scmp.ne.s32.totalorder %s68, %s69
    %p80 = scmp.eq.s32.totalorder %s13, 0
    %p81 = por %p79, %p80
    %p82 = scmp.ne.s32.totalorder %s68, %s69
    %p83 = scmp.eq.s32.totalorder %s14, 1
    %p84 = por %p82, %p83
    %p86 = scmp.ne.s32.totalorder %s69, %s85
    %p87 = scmp.eq.s32.totalorder %s14, 0
    %p88 = por %p86, %p87
    %p89 = scmp.le.s32.totalorder 1, %s8
    %p90 = scmp.lt.s32.totalorder %s8, 3
    %p91 = pnand %p89, %p90
    %p92 = pneg %p91
    // Predicated region
    $region9: #{tpu_custom_call.1} parent=5 // pred_check
      _
    $region10: #{tpu_custom_call.1} parent=5 // pred_check_branch
      %94 = sbr.rel (%p91) target = $region12
    $region11: #{tpu_custom_call.1} parent=5 // pred_region
      %s95 = ssub.s32 %s8, 1
      // Predicated region
      $region13: #{tpu_custom_call.1} parent=11 // pred_check
        %p96 = pneg %p55
      $region14: #{tpu_custom_call.1} parent=11 // pred_check_branch
        %98 = sbr.rel (%p96) target = $region16
      $region15: #{tpu_custom_call.1} parent=11 // pred_region
        _
      $region16: #{tpu_custom_call.1} parent=11 // pred_fallthru
        _
    $region12: #{tpu_custom_call.1} parent=5 // pred_fallthru
      _
    %p99 = scmp.lt.s32.totalorder %s8, 2
    // Predicated region
    $region17: #{tpu_custom_call.1} parent=5 // pred_check
      %p100 = pneg %p99
    $region18: #{tpu_custom_call.1} parent=5 // pred_check_branch
      %102 = sbr.rel (%p100) target = $region20
    $region19: #{tpu_custom_call.1} parent=5 // pred_region
      // Predicated region
      $region21: #{tpu_custom_call.1} parent=19 // pred_check
        %p103 = pneg %p28
      $region22: #{tpu_custom_call.1} parent=19 // pred_check_branch
        %105 = sbr.rel (%p103) target = $region24
      $region23: #{tpu_custom_call.1} parent=19 // pred_region
        %p106 = scmp.lt.s32.totalorder %s8, 1
        %s107 = scalar_select %p106, %s8, 1
        %s108 = smul.addr %s107, 3
        %s109 = smul.addr %s108, 4
        %s110 = scalar_lea.vmem %s0, %s109
      $region24: #{tpu_custom_call.1} parent=19 // pred_fallthru
        _
    $region20: #{tpu_custom_call.1} parent=5 // pred_fallthru
      _
    %p111 = scmp.le.s32.totalorder 1, %s8
    %p112 = scmp.lt.s32.totalorder %s8, 3
    %p113 = pnand %p111, %p112
    %p114 = pneg %p113
    // Predicated region
    $region25: #{tpu_custom_call.1} parent=5 // pred_check
      _
    $region26: #{tpu_custom_call.1} parent=5 // pred_check_branch
      %116 = sbr.rel (%p113) target = $region28
    $region27: #{tpu_custom_call.1} parent=5 // pred_region
      %s117 = ssub.s32 %s8, 1
      %p118 = scmp.lt.s32.totalorder %s13, 1
      %s119 = scalar_select %p118, %s13, 1
      %s120 = smul.addr %s119, 3
      %s121 = smul.addr %s120, 4
      %s122 = scalar_lea.vmem %s0, %s121
      %p123 = pneg %p34
      %p124 = pneg %p31
      %p125 = pneg %p55
      %p126 = pneg %p52
      %p127 = pneg %p81
      %p128 = pneg %p78
      %p129 = scmp.lt.s32.totalorder %s13, 1
      %s130 = scalar_select %p129, %s13, 1
      %s131 = smul.addr %s130, 4
      %s132 = smul.addr %s131, 8
      %s133 = scalar_lea.vmem %s2, %s132
      %p134 = scmp.lt.s32.totalorder %s13, 1
      %s135 = scalar_select %p134, %s13, 1
      %s136 = smul.addr %s135, 3
      %s137 = smul.addr %s136, 4
      %s138 = scalar_lea.vmem %s0, %s137
      %p139 = scmp.lt.s32.totalorder %s13, 1
      %s140 = scalar_select %p139, %s13, 1
      %s141 = smul.addr %s140, 4
      %s142 = smul.addr %s141, 8
      %s143 = scalar_lea.vmem %s2, %s142
      %v144 = vlaneseq
      %v145 = vand.u32 %v144, 127
      %v146 = vadd.s32 %v145, 128
      %vm147 = vcmp.lt.s32.totalorder %v145, 0
      %v148 = vsub.s32 0, %v145
      %v149 = vsel %vm147, %v148, %v145
      %v150 = vshrl.u32 %v149, 4
      %v151 = vand.u32 %v149, 15
      %v152 = vsub.s32 0, %v151
      %v153 = vsel %vm147, %v152, %v151
      %vm154 = vcmp.lt.s32.totalorder %v146, 0
      %v155 = vsub.s32 0, %v146
      %v156 = vsel %vm154, %v155, %v146
      %v157 = vshrl.u32 %v156, 4
      %v158 = vand.u32 %v156, 15
      %v159 = vsub.s32 0, %v158
      %v160 = vsel %vm154, %v159, %v158
      %vm161 = vcmp.ne.s32.totalorder %v153, 0
      %vm162 = vcmp.ne.s32.totalorder %v160, 0
      %vm163 = vcmp.lt.s32.totalorder %v153, 0
      %vm164 = vcmp.lt.s32.totalorder %v160, 0
      %vm165 = vmand %vm163, %vm161
      %vm166 = vmand %vm164, %vm162
      %v167 = vadd.s32 %v153, 16
      %v168 = vadd.s32 %v160, 16
      %v169 = vsel %vm165, %v167, %v153
      %v170 = vsel %vm166, %v168, %v160
      %vm171 = vcmp.ne.s32.totalorder %v169, 0
      %vm172 = vcmp.ne.s32.totalorder %v170, 0
      %vm173 = vcmp.ne.s32.totalorder %v169, 15
      %vm174 = vcmp.ne.s32.totalorder %v170, 15
      %v175 = vld [vmem:[%s138] sm:$0xff]
      %v176 = vld [vmem:[%s138 + $0x8] sm:$0xf]
      %v177 = vsel %vm171, 1, 0
      %v178 = vsel %vm172, 1, 0
      %vm179 = vcmp.eq.s32.totalorder %v177, 1
      %vm180 = vcmp.eq.s32.totalorder %v178, 1
      %v182 = vcombine.high %v175, %v175
      %v184 = vsel %vm179, %v175, 0.0
      %v185 = vsel %vm180, %v182, 0.0
      %v186 = vld [vmem:[%s1] sm:$0xff]
      %s187 = scalar_lea.vmem %s1, 8
      %v188 = vld [vmem:[%s187] sm:$0xff]
      %190 = vrot.lane.b32.xlu0 %v175, 127
      %v191 = vpop.permute.xlu0 %190
      %192 = vrot.lane.b32.xlu0 %v182, 127
      %v193 = vpop.permute.xlu0 %192
      %194 = vrot.lane.b32.xlu0 %v176, 127
      %v195 = vpop.permute.xlu0 %194
      %vm196 = vcmask 1039360
      %v197 = vsel %vm196, %v191, %v193
      %v198 = vsel %vm196, %v193, %v195
      %vm199 = vcmask 31744
      %v201 = vsel %vm199, %v188, 0
      %vm203 = vcmask 1043456
      %v204 = vsel %vm203, %v197, 0
      %v206 = vsel %vm203, %v198, 0
      %208 = vmatprep.subr.mxu0 %v206
      %209 = vmatpush1.msra.mxu0 %v204
      %210 = vmatprep.subr.mxu0 0.0
      %211 = vmatpush1.msra.mxu0 0.0
      %212 = vmatprep.subr.mxu0 0.0
      %213 = vmatpush1.msra.mxu0 0.0
      %214 = vmatprep.subr.mxu0 0.0
      %215 = vmatpush1.msra.mxu0 0.0
      %216 = vmatprep.subr.mxu0 0.0
      %217 = vmatpush1.msra.mxu0 0.0
      %218 = vmatprep.subr.mxu0 0.0
      %219 = vmatpush1.msra.mxu0 0.0
      %220 = vmatprep.subr.mxu0 0.0
      %221 = vmatpush1.msra.mxu0 0.0
      %222 = vmatprep.subr.mxu0 0.0
      %223 = vmatpush1.msra.mxu0 0.0
      %224 = vmatprep.subr.mxu0 0.0
      %225 = vmatpush1.msra.mxu0 0.0
      %226 = vmatprep.subr.mxu0 0.0
      %227 = vmatpush1.msra.mxu0 0.0
      %228 = vmatprep.subr.mxu0 0.0
      %229 = vmatpush1.msra.mxu0 0.0
      %230 = vmatprep.subr.mxu0 0.0
      %231 = vmatpush1.msra.mxu0 0.0
      %232 = vmatprep.subr.mxu0 0.0
      %233 = vmatpush1.msra.mxu0 0.0
      %234 = vmatprep.subr.mxu0 0.0
      %235 = vmatpush1.msra.mxu0 0.0
      %236 = vmatprep.subr.mxu0 0.0
      %237 = vmatpush1.msra.mxu0 0.0
      %238 = vmatprep.subr.mxu0 0.0
      %239 = vmatpush1.msra.mxu0 0.0
      %240 = vmatprep.subr.mxu0 0.0
      %241 = vmatpush1.msra.mxu0 0.0
      %242 = vmatprep.subr.mxu0 0.0
      %243 = vmatpush1.msra.mxu0 0.0
      %244 = vmatprep.subr.mxu0 0.0
      %245 = vmatpush1.msra.mxu0 0.0
      %246 = vmatprep.subr.mxu0 0.0
      %247 = vmatpush1.msra.mxu0 0.0
      %248 = vmatprep.subr.mxu0 0.0
      %249 = vmatpush1.msra.mxu0 0.0
      %250 = vmatprep.subr.mxu0 0.0
      %251 = vmatpush1.msra.mxu0 0.0
      %252 = vmatprep.subr.mxu0 0.0
      %253 = vmatpush1.msra.mxu0 0.0
      %254 = vmatprep.subr.mxu0 0.0
      %255 = vmatpush1.msra.mxu0 0.0
      %256 = vmatprep.subr.mxu0 0.0
      %257 = vmatpush1.msra.mxu0 0.0
      %258 = vmatprep.subr.mxu0 0.0
      %259 = vmatpush1.msra.mxu0 0.0
      %260 = vmatprep.subr.mxu0 0.0
      %261 = vmatpush1.msra.mxu0 0.0
      %262 = vmatprep.subr.mxu0 0.0
      %263 = vmatpush1.msra.mxu0 0.0
      %264 = vmatprep.subr.mxu0 0.0
      %265 = vmatpush1.msra.mxu0 0.0
      %266 = vmatprep.subr.mxu0 0.0
      %267 = vmatpush1.msra.mxu0 0.0
      %268 = vmatprep.subr.mxu0 0.0
      %269 = vmatpush1.msra.mxu0 0.0
      %270 = vmatprep.subr.mxu0 0.0
      %271 = vmatpush1.msra.mxu0 0.0
      %272 = vmatprep.mubr.f32.mxu0 0.0
      %273 = vmatmul.mubr.f32.gmra.mrb[0].mxu0 %v201
      %v274 = vpop.f32.mrb[0].mxu0
      %v275 = vadd.f32 0.0, %v274
      %v276 = vpop.f32.mrb[0].mxu0
      %v277 = vadd.f32 0.0, %v276
      %278 = vdwg.mxu0
      %v280 = vsel %vm199, %v186, 0
      %v283 = vsel %vm203, %v184, 0
      %v286 = vsel %vm203, %v185, 0
      %288 = vmatprep.subr.mxu0 %v286
      %289 = vmatpush1.msra.mxu0 %v283
      %290 = vmatprep.subr.mxu0 0.0
      %291 = vmatpush1.msra.mxu0 0.0
      %292 = vmatprep.subr.mxu0 0.0
      %293 = vmatpush1.msra.mxu0 0.0
      %294 = vmatprep.subr.mxu0 0.0
      %295 = vmatpush1.msra.mxu0 0.0
      %296 = vmatprep.subr.mxu0 0.0
      %297 = vmatpush1.msra.mxu0 0.0
      %298 = vmatprep.subr.mxu0 0.0
      %299 = vmatpush1.msra.mxu0 0.0
      %300 = vmatprep.subr.mxu0 0.0
      %301 = vmatpush1.msra.mxu0 0.0
      %302 = vmatprep.subr.mxu0 0.0
      %303 = vmatpush1.msra.mxu0 0.0
      %304 = vmatprep.subr.mxu0 0.0
      %305 = vmatpush1.msra.mxu0 0.0
      %306 = vmatprep.subr.mxu0 0.0
      %307 = vmatpush1.msra.mxu0 0.0
      %308 = vmatprep.subr.mxu0 0.0
      %309 = vmatpush1.msra.mxu0 0.0
      %310 = vmatprep.subr.mxu0 0.0
      %311 = vmatpush1.msra.mxu0 0.0
      %312 = vmatprep.subr.mxu0 0.0
      %313 = vmatpush1.msra.mxu0 0.0
      %314 = vmatprep.subr.mxu0 0.0
      %315 = vmatpush1.msra.mxu0 0.0
      %316 = vmatprep.subr.mxu0 0.0
      %317 = vmatpush1.msra.mxu0 0.0
      %318 = vmatprep.subr.mxu0 0.0
      %319 = vmatpush1.msra.mxu0 0.0
      %320 = vmatprep.subr.mxu0 0.0
      %321 = vmatpush1.msra.mxu0 0.0
      %322 = vmatprep.subr.mxu0 0.0
      %323 = vmatpush1.msra.mxu0 0.0
      %324 = vmatprep.subr.mxu0 0.0
      %325 = vmatpush1.msra.mxu0 0.0
      %326 = vmatprep.subr.mxu0 0.0
      %327 = vmatpush1.msra.mxu0 0.0
      %328 = vmatprep.subr.mxu0 0.0
      %329 = vmatpush1.msra.mxu0 0.0
      %330 = vmatprep.subr.mxu0 0.0
      %331 = vmatpush1.msra.mxu0 0.0
      %332 = vmatprep.subr.mxu0 0.0
      %333 = vmatpush1.msra.mxu0 0.0
      %334 = vmatprep.subr.mxu0 0.0
      %335 = vmatpush1.msra.mxu0 0.0
      %336 = vmatprep.subr.mxu0 0.0
      %337 = vmatpush1.msra.mxu0 0.0
      %338 = vmatprep.subr.mxu0 0.0
      %339 = vmatpush1.msra.mxu0 0.0
      %340 = vmatprep.subr.mxu0 0.0
      %341 = vmatpush1.msra.mxu0 0.0
      %342 = vmatprep.subr.mxu0 0.0
      %343 = vmatpush1.msra.mxu0 0.0
      %344 = vmatprep.subr.mxu0 0.0
      %345 = vmatpush1.msra.mxu0 0.0
      %346 = vmatprep.subr.mxu0 0.0
      %347 = vmatpush1.msra.mxu0 0.0
      %348 = vmatprep.subr.mxu0 0.0
      %349 = vmatpush1.msra.mxu0 0.0
      %350 = vmatprep.subr.mxu0 0.0
      %351 = vmatpush1.msra.mxu0 0.0
      %352 = vmatprep.mubr.f32.mxu0 0.0
      %353 = vmatmul.mubr.f32.gmra.mrb[0].mxu0 %v280
      %v354 = vpop.f32.mrb[0].mxu0
      %v355 = vadd.f32 %v275, %v354
      %v356 = vpop.f32.mrb[0].mxu0
      %v357 = vadd.f32 %v277, %v356
      %358 = vdwg.mxu0
      %v359 = vld [vmem:[%s138] sm:$0xff]
      %v360 = vld [vmem:[%s138 + $0x8] sm:$0xf]
      %v361 = vsel %vm173, 1, 0
      %v362 = vsel %vm174, 1, 0
      %vm363 = vcmp.eq.s32.totalorder %v361, 1
      %vm364 = vcmp.eq.s32.totalorder %v362, 1
      %v367 = vcombine.high %v359, %v359
      %368 = vrot.lane.b32.xlu0 %v359, 126
      %v369 = vpop.permute.xlu0 %368
      %370 = vrot.lane.b32.xlu0 %v367, 126
      %v371 = vpop.permute.xlu0 %370
      %372 = vrot.lane.b32.xlu0 %v360, 126
      %v373 = vpop.permute.xlu0 %372
      %vm374 = vcmask 1031168
      %v375 = vsel %vm374, %v369, %v371
      %v376 = vsel %vm374, %v371, %v373
      %v379 = vsel %vm363, %v375, 0.0
      %v380 = vsel %vm364, %v376, 0.0
      %s381 = scalar_lea.vmem %s1, 16
      %v382 = vld [vmem:[%s381] sm:$0xff]
      %v384 = vsel %vm199, %v382, 0
      %v387 = vsel %vm203, %v379, 0
      %v390 = vsel %vm203, %v380, 0
      %392 = vmatprep.subr.mxu0 %v390
      %393 = vmatpush1.msra.mxu0 %v387
      %394 = vmatprep.subr.mxu0 0.0
      %395 = vmatpush1.msra.mxu0 0.0
      %396 = vmatprep.subr.mxu0 0.0
      %397 = vmatpush1.msra.mxu0 0.0
      %398 = vmatprep.subr.mxu0 0.0
      %399 = vmatpush1.msra.mxu0 0.0
      %400 = vmatprep.subr.mxu0 0.0
      %401 = vmatpush1.msra.mxu0 0.0
      %402 = vmatprep.subr.mxu0 0.0
      %403 = vmatpush1.msra.mxu0 0.0
      %404 = vmatprep.subr.mxu0 0.0
      %405 = vmatpush1.msra.mxu0 0.0
      %406 = vmatprep.subr.mxu0 0.0
      %407 = vmatpush1.msra.mxu0 0.0
      %408 = vmatprep.subr.mxu0 0.0
      %409 = vmatpush1.msra.mxu0 0.0
      %410 = vmatprep.subr.mxu0 0.0
      %411 = vmatpush1.msra.mxu0 0.0
      %412 = vmatprep.subr.mxu0 0.0
      %413 = vmatpush1.msra.mxu0 0.0
      %414 = vmatprep.subr.mxu0 0.0
      %415 = vmatpush1.msra.mxu0 0.0
      %416 = vmatprep.subr.mxu0 0.0
      %417 = vmatpush1.msra.mxu0 0.0
      %418 = vmatprep.subr.mxu0 0.0
      %419 = vmatpush1.msra.mxu0 0.0
      %420 = vmatprep.subr.mxu0 0.0
      %421 = vmatpush1.msra.mxu0 0.0
      %422 = vmatprep.subr.mxu0 0.0
      %423 = vmatpush1.msra.mxu0 0.0
      %424 = vmatprep.subr.mxu0 0.0
      %425 = vmatpush1.msra.mxu0 0.0
      %426 = vmatprep.subr.mxu0 0.0
      %427 = vmatpush1.msra.mxu0 0.0
      %428 = vmatprep.subr.mxu0 0.0
      %429 = vmatpush1.msra.mxu0 0.0
      %430 = vmatprep.subr.mxu0 0.0
      %431 = vmatpush1.msra.mxu0 0.0
      %432 = vmatprep.subr.mxu0 0.0
      %433 = vmatpush1.msra.mxu0 0.0
      %434 = vmatprep.subr.mxu0 0.0
      %435 = vmatpush1.msra.mxu0 0.0
      %436 = vmatprep.subr.mxu0 0.0
      %437 = vmatpush1.msra.mxu0 0.0
      %438 = vmatprep.subr.mxu0 0.0
      %439 = vmatpush1.msra.mxu0 0.0
      %440 = vmatprep.subr.mxu0 0.0
      %441 = vmatpush1.msra.mxu0 0.0
      %442 = vmatprep.subr.mxu0 0.0
      %443 = vmatpush1.msra.mxu0 0.0
      %444 = vmatprep.subr.mxu0 0.0
      %445 = vmatpush1.msra.mxu0 0.0
      %446 = vmatprep.subr.mxu0 0.0
      %447 = vmatpush1.msra.mxu0 0.0
      %448 = vmatprep.subr.mxu0 0.0
      %449 = vmatpush1.msra.mxu0 0.0
      %450 = vmatprep.subr.mxu0 0.0
      %451 = vmatpush1.msra.mxu0 0.0
      %452 = vmatprep.subr.mxu0 0.0
      %453 = vmatpush1.msra.mxu0 0.0
      %454 = vmatprep.subr.mxu0 0.0
      %455 = vmatpush1.msra.mxu0 0.0
      %456 = vmatprep.mubr.f32.mxu0 0.0
      %457 = vmatmul.mubr.f32.gmra.mrb[0].mxu0 %v384
      %v458 = vpop.f32.mrb[0].mxu0
      %v459 = vadd.f32 0.0, %v458
      %v460 = vpop.f32.mrb[0].mxu0
      %v461 = vadd.f32 0.0, %v460
      %462 = vdwg.mxu0
      %v463 = vadd.f32 %v355, %v459
      %v464 = vadd.f32 %v357, %v461
      %v465 = vld [vmem:[%s138] sm:$0xff]
      %v466 = vld [vmem:[%s138 + $0x8] sm:$0xf]
      %v469 = vcombine.high %v465, %v465
      %470 = vrot.lane.b32.xlu0 %v465, 112
      %v471 = vpop.permute.xlu0 %470
      %472 = vrot.lane.b32.xlu0 %v469, 112
      %v473 = vpop.permute.xlu0 %472
      %474 = vrot.lane.b32.xlu0 %v466, 112
      %v475 = vpop.permute.xlu0 %474
      %vm476 = vcmask 916480
      %v477 = vsel %vm476, %v471, %v473
      %v478 = vsel %vm476, %v473, %v475
      %v481 = vsel %vm179, %v477, 0.0
      %v482 = vsel %vm180, %v478, 0.0
      %s483 = scalar_lea.vmem %s1, 24
      %v484 = vld [vmem:[%s483] sm:$0xff]
      %v486 = vsel %vm199, %v484, 0
      %v489 = vsel %vm203, %v481, 0
      %v492 = vsel %vm203, %v482, 0
      %494 = vmatprep.subr.mxu0 %v492
      %495 = vmatpush1.msra.mxu0 %v489
      %496 = vmatprep.subr.mxu0 0.0
      %497 = vmatpush1.msra.mxu0 0.0
      %498 = vmatprep.subr.mxu0 0.0
      %499 = vmatpush1.msra.mxu0 0.0
      %500 = vmatprep.subr.mxu0 0.0
      %501 = vmatpush1.msra.mxu0 0.0
      %502 = vmatprep.subr.mxu0 0.0
      %503 = vmatpush1.msra.mxu0 0.0
      %504 = vmatprep.subr.mxu0 0.0
      %505 = vmatpush1.msra.mxu0 0.0
      %506 = vmatprep.subr.mxu0 0.0
      %507 = vmatpush1.msra.mxu0 0.0
      %508 = vmatprep.subr.mxu0 0.0
      %509 = vmatpush1.msra.mxu0 0.0
      %510 = vmatprep.subr.mxu0 0.0
      %511 = vmatpush1.msra.mxu0 0.0
      %512 = vmatprep.subr.mxu0 0.0
      %513 = vmatpush1.msra.mxu0 0.0
      %514 = vmatprep.subr.mxu0 0.0
      %515 = vmatpush1.msra.mxu0 0.0
      %516 = vmatprep.subr.mxu0 0.0
      %517 = vmatpush1.msra.mxu0 0.0
      %518 = vmatprep.subr.mxu0 0.0
      %519 = vmatpush1.msra.mxu0 0.0
      %520 = vmatprep.subr.mxu0 0.0
      %521 = vmatpush1.msra.mxu0 0.0
      %522 = vmatprep.subr.mxu0 0.0
      %523 = vmatpush1.msra.mxu0 0.0
      %524 = vmatprep.subr.mxu0 0.0
      %525 = vmatpush1.msra.mxu0 0.0
      %526 = vmatprep.subr.mxu0 0.0
      %527 = vmatpush1.msra.mxu0 0.0
      %528 = vmatprep.subr.mxu0 0.0
      %529 = vmatpush1.msra.mxu0 0.0
      %530 = vmatprep.subr.mxu0 0.0
      %531 = vmatpush1.msra.mxu0 0.0
      %532 = vmatprep.subr.mxu0 0.0
      %533 = vmatpush1.msra.mxu0 0.0
      %534 = vmatprep.subr.mxu0 0.0
      %535 = vmatpush1.msra.mxu0 0.0
      %536 = vmatprep.subr.mxu0 0.0
      %537 = vmatpush1.msra.mxu0 0.0
      %538 = vmatprep.subr.mxu0 0.0
      %539 = vmatpush1.msra.mxu0 0.0
      %540 = vmatprep.subr.mxu0 0.0
      %541 = vmatpush1.msra.mxu0 0.0
      %542 = vmatprep.subr.mxu0 0.0
      %543 = vmatpush1.msra.mxu0 0.0
      %544 = vmatprep.subr.mxu0 0.0
      %545 = vmatpush1.msra.mxu0 0.0
      %546 = vmatprep.subr.mxu0 0.0
      %547 = vmatpush1.msra.mxu0 0.0
      %548 = vmatprep.subr.mxu0 0.0
      %549 = vmatpush1.msra.mxu0 0.0
      %550 = vmatprep.subr.mxu0 0.0
      %551 = vmatpush1.msra.mxu0 0.0
      %552 = vmatprep.subr.mxu0 0.0
      %553 = vmatpush1.msra.mxu0 0.0
      %554 = vmatprep.subr.mxu0 0.0
      %555 = vmatpush1.msra.mxu0 0.0
      %556 = vmatprep.subr.mxu0 0.0
      %557 = vmatpush1.msra.mxu0 0.0
      %558 = vmatprep.mubr.f32.mxu0 0.0
      %559 = vmatmul.mubr.f32.gmra.mrb[0].mxu0 %v486
      %v560 = vpop.f32.mrb[0].mxu0
      %v561 = vadd.f32 0.0, %v560
      %v562 = vpop.f32.mrb[0].mxu0
      %v563 = vadd.f32 0.0, %v562
      %564 = vdwg.mxu0
      %v565 = vadd.f32 %v463, %v561
      %v566 = vadd.f32 %v464, %v563
      %s567 = scalar_lea.vmem %s1, 32
      %v568 = vld [vmem:[%s567] sm:$0xff]
      %569 = vrot.lane.b32.xlu0 %v175, 111
      %v570 = vpop.permute.xlu0 %569
      %571 = vrot.lane.b32.xlu0 %v182, 111
      %v572 = vpop.permute.xlu0 %571
      %573 = vrot.lane.b32.xlu0 %v176, 111
      %v574 = vpop.permute.xlu0 %573
      %vm575 = vcmask 908288
      %v576 = vsel %vm575, %v570, %v572
      %v577 = vsel %vm575, %v572, %v574
      %v579 = vsel %vm199, %v568, 0
      %v581 = vsel %vm203, %v576, 0
      %v583 = vsel %vm203, %v577, 0
      %585 = vmatprep.subr.mxu0 %v583
      %586 = vmatpush1.msra.mxu0 %v581
      %587 = vmatprep.subr.mxu0 0.0
      %588 = vmatpush1.msra.mxu0 0.0
      %589 = vmatprep.subr.mxu0 0.0
      %590 = vmatpush1.msra.mxu0 0.0
      %591 = vmatprep.subr.mxu0 0.0
      %592 = vmatpush1.msra.mxu0 0.0
      %593 = vmatprep.subr.mxu0 0.0
      %594 = vmatpush1.msra.mxu0 0.0
      %595 = vmatprep.subr.mxu0 0.0
      %596 = vmatpush1.msra.mxu0 0.0
      %597 = vmatprep.subr.mxu0 0.0
      %598 = vmatpush1.msra.mxu0 0.0
      %599 = vmatprep.subr.mxu0 0.0
      %600 = vmatpush1.msra.mxu0 0.0
      %601 = vmatprep.subr.mxu0 0.0
      %602 = vmatpush1.msra.mxu0 0.0
      %603 = vmatprep.subr.mxu0 0.0
      %604 = vmatpush1.msra.mxu0 0.0
      %605 = vmatprep.subr.mxu0 0.0
      %606 = vmatpush1.msra.mxu0 0.0
      %607 = vmatprep.subr.mxu0 0.0
      %608 = vmatpush1.msra.mxu0 0.0
      %609 = vmatprep.subr.mxu0 0.0
      %610 = vmatpush1.msra.mxu0 0.0
      %611 = vmatprep.subr.mxu0 0.0
      %612 = vmatpush1.msra.mxu0 0.0
      %613 = vmatprep.subr.mxu0 0.0
      %614 = vmatpush1.msra.mxu0 0.0
      %615 = vmatprep.subr.mxu0 0.0
      %616 = vmatpush1.msra.mxu0 0.0
      %617 = vmatprep.subr.mxu0 0.0
      %618 = vmatpush1.msra.mxu0 0.0
      %619 = vmatprep.subr.mxu0 0.0
      %620 = vmatpush1.msra.mxu0 0.0
      %621 = vmatprep.subr.mxu0 0.0
      %622 = vmatpush1.msra.mxu0 0.0
      %623 = vmatprep.subr.mxu0 0.0
      %624 = vmatpush1.msra.mxu0 0.0
      %625 = vmatprep.subr.mxu0 0.0
      %626 = vmatpush1.msra.mxu0 0.0
      %627 = vmatprep.subr.mxu0 0.0
      %628 = vmatpush1.msra.mxu0 0.0
      %629 = vmatprep.subr.mxu0 0.0
      %630 = vmatpush1.msra.mxu0 0.0
      %631 = vmatprep.subr.mxu0 0.0
      %632 = vmatpush1.msra.mxu0 0.0
      %633 = vmatprep.subr.mxu0 0.0
      %634 = vmatpush1.msra.mxu0 0.0
      %635 = vmatprep.subr.mxu0 0.0
      %636 = vmatpush1.msra.mxu0 0.0
      %637 = vmatprep.subr.mxu0 0.0
      %638 = vmatpush1.msra.mxu0 0.0
      %639 = vmatprep.subr.mxu0 0.0
      %640 = vmatpush1.msra.mxu0 0.0
      %641 = vmatprep.subr.mxu0 0.0
      %642 = vmatpush1.msra.mxu0 0.0
      %643 = vmatprep.subr.mxu0 0.0
      %644 = vmatpush1.msra.mxu0 0.0
      %645 = vmatprep.subr.mxu0 0.0
      %646 = vmatpush1.msra.mxu0 0.0
      %647 = vmatprep.subr.mxu0 0.0
      %648 = vmatpush1.msra.mxu0 0.0
      %649 = vmatprep.mubr.f32.mxu0 0.0
      %650 = vmatmul.mubr.f32.gmra.mrb[0].mxu0 %v579
      %v651 = vpop.f32.mrb[0].mxu0
      %v652 = vadd.f32 0.0, %v651
      %v653 = vpop.f32.mrb[0].mxu0
      %v654 = vadd.f32 0.0, %v653
      %655 = vdwg.mxu0
      %v656 = vadd.f32 %v565, %v652
      %v657 = vadd.f32 %v566, %v654
      %v658 = vld [vmem:[%s138] sm:$0xff]
      %v659 = vld [vmem:[%s138 + $0x8] sm:$0xf]
      %v662 = vcombine.high %v658, %v658
      %663 = vrot.lane.b32.xlu0 %v658, 110
      %v664 = vpop.permute.xlu0 %663
      %665 = vrot.lane.b32.xlu0 %v662, 110
      %v666 = vpop.permute.xlu0 %665
      %667 = vrot.lane.b32.xlu0 %v659, 110
      %v668 = vpop.permute.xlu0 %667
      %vm669 = vcmask 900096
      %v670 = vsel %vm669, %v664, %v666
      %v671 = vsel %vm669, %v666, %v668
      %v674 = vsel %vm363, %v670, 0.0
      %v675 = vsel %vm364, %v671, 0.0
      %s676 = scalar_lea.vmem %s1, 40
      %v677 = vld [vmem:[%s676] sm:$0xff]
      %v679 = vsel %vm199, %v677, 0
      %v682 = vsel %vm203, %v674, 0
      %v685 = vsel %vm203, %v675, 0
      %687 = vmatprep.subr.mxu0 %v685
      %688 = vmatpush1.msra.mxu0 %v682
      %689 = vmatprep.subr.mxu0 0.0
      %690 = vmatpush1.msra.mxu0 0.0
      %691 = vmatprep.subr.mxu0 0.0
      %692 = vmatpush1.msra.mxu0 0.0
      %693 = vmatprep.subr.mxu0 0.0
      %694 = vmatpush1.msra.mxu0 0.0
      %695 = vmatprep.subr.mxu0 0.0
      %696 = vmatpush1.msra.mxu0 0.0
      %697 = vmatprep.subr.mxu0 0.0
      %698 = vmatpush1.msra.mxu0 0.0
      %699 = vmatprep.subr.mxu0 0.0
      %700 = vmatpush1.msra.mxu0 0.0
      %701 = vmatprep.subr.mxu0 0.0
      %702 = vmatpush1.msra.mxu0 0.0
      %703 = vmatprep.subr.mxu0 0.0
      %704 = vmatpush1.msra.mxu0 0.0
      %705 = vmatprep.subr.mxu0 0.0
      %706 = vmatpush1.msra.mxu0 0.0
      %707 = vmatprep.subr.mxu0 0.0
      %708 = vmatpush1.msra.mxu0 0.0
      %709 = vmatprep.subr.mxu0 0.0
      %710 = vmatpush1.msra.mxu0 0.0
      %711 = vmatprep.subr.mxu0 0.0
      %712 = vmatpush1.msra.mxu0 0.0
      %713 = vmatprep.subr.mxu0 0.0
      %714 = vmatpush1.msra.mxu0 0.0
      %715 = vmatprep.subr.mxu0 0.0
      %716 = vmatpush1.msra.mxu0 0.0
      %717 = vmatprep.subr.mxu0 0.0
      %718 = vmatpush1.msra.mxu0 0.0
      %719 = vmatprep.subr.mxu0 0.0
      %720 = vmatpush1.msra.mxu0 0.0
      %721 = vmatprep.subr.mxu0 0.0
      %722 = vmatpush1.msra.mxu0 0.0
      %723 = vmatprep.subr.mxu0 0.0
      %724 = vmatpush1.msra.mxu0 0.0
      %725 = vmatprep.subr.mxu0 0.0
      %726 = vmatpush1.msra.mxu0 0.0
      %727 = vmatprep.subr.mxu0 0.0
      %728 = vmatpush1.msra.mxu0 0.0
      %729 = vmatprep.subr.mxu0 0.0
      %730 = vmatpush1.msra.mxu0 0.0
      %731 = vmatprep.subr.mxu0 0.0
      %732 = vmatpush1.msra.mxu0 0.0
      %733 = vmatprep.subr.mxu0 0.0
      %734 = vmatpush1.msra.mxu0 0.0
      %735 = vmatprep.subr.mxu0 0.0
      %736 = vmatpush1.msra.mxu0 0.0
      %737 = vmatprep.subr.mxu0 0.0
      %738 = vmatpush1.msra.mxu0 0.0
      %739 = vmatprep.subr.mxu0 0.0
      %740 = vmatpush1.msra.mxu0 0.0
      %741 = vmatprep.subr.mxu0 0.0
      %742 = vmatpush1.msra.mxu0 0.0
      %743 = vmatprep.subr.mxu0 0.0
      %744 = vmatpush1.msra.mxu0 0.0
      %745 = vmatprep.subr.mxu0 0.0
      %746 = vmatpush1.msra.mxu0 0.0
      %747 = vmatprep.subr.mxu0 0.0
      %748 = vmatpush1.msra.mxu0 0.0
      %749 = vmatprep.subr.mxu0 0.0
      %750 = vmatpush1.msra.mxu0 0.0
      %751 = vmatprep.mubr.f32.mxu0 0.0
      %752 = vmatmul.mubr.f32.gmra.mrb[0].mxu0 %v679
      %v753 = vpop.f32.mrb[0].mxu0
      %v754 = vadd.f32 0.0, %v753
      %v755 = vpop.f32.mrb[0].mxu0
      %v756 = vadd.f32 0.0, %v755
      %757 = vdwg.mxu0
      %v758 = vadd.f32 %v656, %v754
      %v759 = vadd.f32 %v657, %v756
      %v760 = vld [vmem:[%s138] sm:$0xff]
      %v761 = vld [vmem:[%s138 + $0x8] sm:$0xf]
      %v764 = vcombine.high %v760, %v760
      %765 = vrot.lane.b32.xlu0 %v760, 96
      %v766 = vpop.permute.xlu0 %765
      %767 = vrot.lane.b32.xlu0 %v764, 96
      %v768 = vpop.permute.xlu0 %767
      %769 = vrot.lane.b32.xlu0 %v761, 96
      %v770 = vpop.permute.xlu0 %769
      %vm771 = vcmask 785408
      %v772 = vsel %vm771, %v766, %v768
      %v773 = vsel %vm771, %v768, %v770
      %v776 = vsel %vm179, %v772, 0.0
      %v777 = vsel %vm180, %v773, 0.0
      %s778 = scalar_lea.vmem %s1, 48
      %v779 = vld [vmem:[%s778] sm:$0xff]
      %v781 = vsel %vm199, %v779, 0
      %v784 = vsel %vm203, %v776, 0
      %v787 = vsel %vm203, %v777, 0
      %789 = vmatprep.subr.mxu0 %v787
      %790 = vmatpush1.msra.mxu0 %v784
      %791 = vmatprep.subr.mxu0 0.0
      %792 = vmatpush1.msra.mxu0 0.0
      %793 = vmatprep.subr.mxu0 0.0
      %794 = vmatpush1.msra.mxu0 0.0
      %795 = vmatprep.subr.mxu0 0.0
      %796 = vmatpush1.msra.mxu0 0.0
      %797 = vmatprep.subr.mxu0 0.0
      %798 = vmatpush1.msra.mxu0 0.0
      %799 = vmatprep.subr.mxu0 0.0
      %800 = vmatpush1.msra.mxu0 0.0
      %801 = vmatprep.subr.mxu0 0.0
      %802 = vmatpush1.msra.mxu0 0.0
      %803 = vmatprep.subr.mxu0 0.0
      %804 = vmatpush1.msra.mxu0 0.0
      %805 = vmatprep.subr.mxu0 0.0
      %806 = vmatpush1.msra.mxu0 0.0
      %807 = vmatprep.subr.mxu0 0.0
      %808 = vmatpush1.msra.mxu0 0.0
      %809 = vmatprep.subr.mxu0 0.0
      %810 = vmatpush1.msra.mxu0 0.0
      %811 = vmatprep.subr.mxu0 0.0
      %812 = vmatpush1.msra.mxu0 0.0
      %813 = vmatprep.subr.mxu0 0.0
      %814 = vmatpush1.msra.mxu0 0.0
      %815 = vmatprep.subr.mxu0 0.0
      %816 = vmatpush1.msra.mxu0 0.0
      %817 = vmatprep.subr.mxu0 0.0
      %818 = vmatpush1.msra.mxu0 0.0
      %819 = vmatprep.subr.mxu0 0.0
      %820 = vmatpush1.msra.mxu0 0.0
      %821 = vmatprep.subr.mxu0 0.0
      %822 = vmatpush1.msra.mxu0 0.0
      %823 = vmatprep.subr.mxu0 0.0
      %824 = vmatpush1.msra.mxu0 0.0
      %825 = vmatprep.subr.mxu0 0.0
      %826 = vmatpush1.msra.mxu0 0.0
      %827 = vmatprep.subr.mxu0 0.0
      %828 = vmatpush1.msra.mxu0 0.0
      %829 = vmatprep.subr.mxu0 0.0
      %830 = vmatpush1.msra.mxu0 0.0
      %831 = vmatprep.subr.mxu0 0.0
      %832 = vmatpush1.msra.mxu0 0.0
      %833 = vmatprep.subr.mxu0 0.0
      %834 = vmatpush1.msra.mxu0 0.0
      %835 = vmatprep.subr.mxu0 0.0
      %836 = vmatpush1.msra.mxu0 0.0
      %837 = vmatprep.subr.mxu0 0.0
      %838 = vmatpush1.msra.mxu0 0.0
      %839 = vmatprep.subr.mxu0 0.0
      %840 = vmatpush1.msra.mxu0 0.0
      %841 = vmatprep.subr.mxu0 0.0
      %842 = vmatpush1.msra.mxu0 0.0
      %843 = vmatprep.subr.mxu0 0.0
      %844 = vmatpush1.msra.mxu0 0.0
      %845 = vmatprep.subr.mxu0 0.0
      %846 = vmatpush1.msra.mxu0 0.0
      %847 = vmatprep.subr.mxu0 0.0
      %848 = vmatpush1.msra.mxu0 0.0
      %849 = vmatprep.subr.mxu0 0.0
      %850 = vmatpush1.msra.mxu0 0.0
      %851 = vmatprep.subr.mxu0 0.0
      %852 = vmatpush1.msra.mxu0 0.0
      %853 = vmatprep.mubr.f32.mxu0 0.0
      %854 = vmatmul.mubr.f32.gmra.mrb[0].mxu0 %v781
      %v855 = vpop.f32.mrb[0].mxu0
      %v856 = vadd.f32 0.0, %v855
      %v857 = vpop.f32.mrb[0].mxu0
      %v858 = vadd.f32 0.0, %v857
      %859 = vdwg.mxu0
      %v860 = vadd.f32 %v758, %v856
      %v861 = vadd.f32 %v759, %v858
      %v862 = vld [vmem:[%s138] sm:$0xff]
      %v863 = vld [vmem:[%s138 + $0x8] sm:$0xf]
      %s864 = scalar_lea.vmem %s1, 56
      %v865 = vld [vmem:[%s864] sm:$0xff]
      %v868 = vcombine.high %v862, %v862
      %869 = vrot.lane.b32.xlu0 %v862, 95
      %v870 = vpop.permute.xlu0 %869
      %871 = vrot.lane.b32.xlu0 %v868, 95
      %v872 = vpop.permute.xlu0 %871
      %873 = vrot.lane.b32.xlu0 %v863, 95
      %v874 = vpop.permute.xlu0 %873
      %vm875 = vcmask 777216
      %v876 = vsel %vm875, %v870, %v872
      %v877 = vsel %vm875, %v872, %v874
      %v879 = vsel %vm199, %v865, 0
      %v881 = vsel %vm203, %v876, 0
      %v883 = vsel %vm203, %v877, 0
      %885 = vmatprep.subr.mxu0 %v883
      %886 = vmatpush1.msra.mxu0 %v881
      %887 = vmatprep.subr.mxu0 0.0
      %888 = vmatpush1.msra.mxu0 0.0
      %889 = vmatprep.subr.mxu0 0.0
      %890 = vmatpush1.msra.mxu0 0.0
      %891 = vmatprep.subr.mxu0 0.0
      %892 = vmatpush1.msra.mxu0 0.0
      %893 = vmatprep.subr.mxu0 0.0
      %894 = vmatpush1.msra.mxu0 0.0
      %895 = vmatprep.subr.mxu0 0.0
      %896 = vmatpush1.msra.mxu0 0.0
      %897 = vmatprep.subr.mxu0 0.0
      %898 = vmatpush1.msra.mxu0 0.0
      %899 = vmatprep.subr.mxu0 0.0
      %900 = vmatpush1.msra.mxu0 0.0
      %901 = vmatprep.subr.mxu0 0.0
      %902 = vmatpush1.msra.mxu0 0.0
      %903 = vmatprep.subr.mxu0 0.0
      %904 = vmatpush1.msra.mxu0 0.0
      %905 = vmatprep.subr.mxu0 0.0
      %906 = vmatpush1.msra.mxu0 0.0
      %907 = vmatprep.subr.mxu0 0.0
      %908 = vmatpush1.msra.mxu0 0.0
      %909 = vmatprep.subr.mxu0 0.0
      %910 = vmatpush1.msra.mxu0 0.0
      %911 = vmatprep.subr.mxu0 0.0
      %912 = vmatpush1.msra.mxu0 0.0
      %913 = vmatprep.subr.mxu0 0.0
      %914 = vmatpush1.msra.mxu0 0.0
      %915 = vmatprep.subr.mxu0 0.0
      %916 = vmatpush1.msra.mxu0 0.0
      %917 = vmatprep.subr.mxu0 0.0
      %918 = vmatpush1.msra.mxu0 0.0
      %919 = vmatprep.subr.mxu0 0.0
      %920 = vmatpush1.msra.mxu0 0.0
      %921 = vmatprep.subr.mxu0 0.0
      %922 = vmatpush1.msra.mxu0 0.0
      %923 = vmatprep.subr.mxu0 0.0
      %924 = vmatpush1.msra.mxu0 0.0
      %925 = vmatprep.subr.mxu0 0.0
      %926 = vmatpush1.msra.mxu0 0.0
      %927 = vmatprep.subr.mxu0 0.0
      %928 = vmatpush1.msra.mxu0 0.0
      %929 = vmatprep.subr.mxu0 0.0
      %930 = vmatpush1.msra.mxu0 0.0
      %931 = vmatprep.subr.mxu0 0.0
      %932 = vmatpush1.msra.mxu0 0.0
      %933 = vmatprep.subr.mxu0 0.0
      %934 = vmatpush1.msra.mxu0 0.0
      %935 = vmatprep.subr.mxu0 0.0
      %936 = vmatpush1.msra.mxu0 0.0
      %937 = vmatprep.subr.mxu0 0.0
      %938 = vmatpush1.msra.mxu0 0.0
      %939 = vmatprep.subr.mxu0 0.0
      %940 = vmatpush1.msra.mxu0 0.0
      %941 = vmatprep.subr.mxu0 0.0
      %942 = vmatpush1.msra.mxu0 0.0
      %943 = vmatprep.subr.mxu0 0.0
      %944 = vmatpush1.msra.mxu0 0.0
      %945 = vmatprep.subr.mxu0 0.0
      %946 = vmatpush1.msra.mxu0 0.0
      %947 = vmatprep.subr.mxu0 0.0
      %948 = vmatpush1.msra.mxu0 0.0
      %949 = vmatprep.mubr.f32.mxu0 0.0
      %950 = vmatmul.mubr.f32.gmra.mrb[0].mxu0 %v879
      %v951 = vpop.f32.mrb[0].mxu0
      %v952 = vadd.f32 0.0, %v951
      %v953 = vpop.f32.mrb[0].mxu0
      %v954 = vadd.f32 0.0, %v953
      %955 = vdwg.mxu0
      %v956 = vadd.f32 %v860, %v952
      %v957 = vadd.f32 %v861, %v954
      %v958 = vld [vmem:[%s138] sm:$0xff]
      %v959 = vld [vmem:[%s138 + $0x8] sm:$0xf]
      %v962 = vcombine.high %v958, %v958
      %963 = vrot.lane.b32.xlu0 %v958, 94
      %v964 = vpop.permute.xlu0 %963
      %965 = vrot.lane.b32.xlu0 %v962, 94
      %v966 = vpop.permute.xlu0 %965
      %967 = vrot.lane.b32.xlu0 %v959, 94
      %v968 = vpop.permute.xlu0 %967
      %vm969 = vcmask 769024
      %v970 = vsel %vm969, %v964, %v966
      %v971 = vsel %vm969, %v966, %v968
      %v974 = vsel %vm363, %v970, 0.0
      %v975 = vsel %vm364, %v971, 0.0
      %s976 = scalar_lea.vmem %s1, 64
      %v977 = vld [vmem:[%s976] sm:$0xff]
      %v979 = vsel %vm199, %v977, 0
      %v982 = vsel %vm203, %v974, 0
      %v985 = vsel %vm203, %v975, 0
      %987 = vmatprep.subr.mxu0 %v985
      %988 = vmatpush1.msra.mxu0 %v982
      %989 = vmatprep.subr.mxu0 0.0
      %990 = vmatpush1.msra.mxu0 0.0
      %991 = vmatprep.subr.mxu0 0.0
      %992 = vmatpush1.msra.mxu0 0.0
      %993 = vmatprep.subr.mxu0 0.0
      %994 = vmatpush1.msra.mxu0 0.0
      %995 = vmatprep.subr.mxu0 0.0
      %996 = vmatpush1.msra.mxu0 0.0
      %997 = vmatprep.subr.mxu0 0.0
      %998 = vmatpush1.msra.mxu0 0.0
      %999 = vmatprep.subr.mxu0 0.0
      %1000 = vmatpush1.msra.mxu0 0.0
      %1001 = vmatprep.subr.mxu0 0.0
      %1002 = vmatpush1.msra.mxu0 0.0
      %1003 = vmatprep.subr.mxu0 0.0
      %1004 = vmatpush1.msra.mxu0 0.0
      %1005 = vmatprep.subr.mxu0 0.0
      %1006 = vmatpush1.msra.mxu0 0.0
      %1007 = vmatprep.subr.mxu0 0.0
      %1008 = vmatpush1.msra.mxu0 0.0
      %1009 = vmatprep.subr.mxu0 0.0
      %1010 = vmatpush1.msra.mxu0 0.0
      %1011 = vmatprep.subr.mxu0 0.0
      %1012 = vmatpush1.msra.mxu0 0.0
      %1013 = vmatprep.subr.mxu0 0.0
      %1014 = vmatpush1.msra.mxu0 0.0
      %1015 = vmatprep.subr.mxu0 0.0
      %1016 = vmatpush1.msra.mxu0 0.0
      %1017 = vmatprep.subr.mxu0 0.0
      %1018 = vmatpush1.msra.mxu0 0.0
      %1019 = vmatprep.subr.mxu0 0.0
      %1020 = vmatpush1.msra.mxu0 0.0
      %1021 = vmatprep.subr.mxu0 0.0
      %1022 = vmatpush1.msra.mxu0 0.0
      %1023 = vmatprep.subr.mxu0 0.0
      %1024 = vmatpush1.msra.mxu0 0.0
      %1025 = vmatprep.subr.mxu0 0.0
      %1026 = vmatpush1.msra.mxu0 0.0
      %1027 = vmatprep.subr.mxu0 0.0
      %1028 = vmatpush1.msra.mxu0 0.0
      %1029 = vmatprep.subr.mxu0 0.0
      %1030 = vmatpush1.msra.mxu0 0.0
      %1031 = vmatprep.subr.mxu0 0.0
      %1032 = vmatpush1.msra.mxu0 0.0
      %1033 = vmatprep.subr.mxu0 0.0
      %1034 = vmatpush1.msra.mxu0 0.0
      %1035 = vmatprep.subr.mxu0 0.0
      %1036 = vmatpush1.msra.mxu0 0.0
      %1037 = vmatprep.subr.mxu0 0.0
      %1038 = vmatpush1.msra.mxu0 0.0
      %1039 = vmatprep.subr.mxu0 0.0
      %1040 = vmatpush1.msra.mxu0 0.0
      %1041 = vmatprep.subr.mxu0 0.0
      %1042 = vmatpush1.msra.mxu0 0.0
      %1043 = vmatprep.subr.mxu0 0.0
      %1044 = vmatpush1.msra.mxu0 0.0
      %1045 = vmatprep.subr.mxu0 0.0
      %1046 = vmatpush1.msra.mxu0 0.0
      %1047 = vmatprep.subr.mxu0 0.0
      %1048 = vmatpush1.msra.mxu0 0.0
      %1049 = vmatprep.subr.mxu0 0.0
      %1050 = vmatpush1.msra.mxu0 0.0
      %1051 = vmatprep.mubr.f32.mxu0 0.0
      %1052 = vmatmul.mubr.f32.gmra.mrb[0].mxu0 %v979
      %v1053 = vpop.f32.mrb[0].mxu0
      %v1054 = vadd.f32 0.0, %v1053
      %v1055 = vpop.f32.mrb[0].mxu0
      %v1056 = vadd.f32 0.0, %v1055
      %1057 = vdwg.mxu0
      %v1058 = vadd.f32 %v956, %v1054
      %v1059 = vadd.f32 %v957, %v1056
      %v1060 = vadd.f32 %v1058, %v1059
      %1061 = vadd.xlane.f32.xlu0 %v1060
      %v1062 = vpop.xlane.xlu0 %1061
      %v1063 = vmul.f32 %v1062, 0.00390625
      %v1064 = vsub.f32 %v1058, %v1063
      %v1065 = vsub.f32 %v1059, %v1063
      %v1066 = vmul.f32 %v1064, %v1064
      %v1067 = vmul.f32 %v1065, %v1065
      %v1068 = vadd.f32 %v1066, %v1067
      %1069 = vadd.xlane.f32.xlu0 %v1068
      %v1070 = vpop.xlane.xlu0 %1069
      %v1071 = vmul.f32 %v1070, 0.00390625
      %v1072 = vadd.f32 %v1071, 1e-05
      %v1073 = vrsqrt.pop %v1072
      %v1074 = vmul.f32 %v1064, %v1073
      %v1075 = vmul.f32 %v1065, %v1073
      %v1076 = vmax.f32 %v1074, 0.0
      %v1077 = vmax.f32 %v1075, 0.0
      %1080 = vst [vmem:[%s143] sm:$0xf] %v576
      %1081 = vst [vmem:[%s143 + $0x8] sm:$0xf] %v577
      %v1084 = vrot.slane %v1076, 4
      %v1085 = vrot.slane %v1077, 4
      %1088 = vst [vmem:[%s143] sm:$0xf0] %v1084
      %1089 = vst [vmem:[%s143 + $0x8] sm:$0xf0] %v1085
      %1090 = vst [vmem:[%s143 + $0x10] sm:$0xf] %v1084
      %1091 = vst [vmem:[%s143 + $0x18] sm:$0xf] %v1085
      %p1092 = scmp.lt.s32.totalorder %s13, 1
      %s1093 = scalar_select %p1092, %s13, 1
      %s1094 = smul.addr %s1093, 4
      %s1095 = smul.addr %s1094, 8
      %s1096 = scalar_lea.vmem %s2, %s1095
      // Predicated region
      $region29: #{tpu_custom_call.1} parent=27 // pred_check
        %p1097 = pneg %p78
      $region30: #{tpu_custom_call.1} parent=27 // pred_check_branch
        %1099 = sbr.rel (%p1097) target = $region32
      $region31: #{tpu_custom_call.1} parent=27 // pred_region
        _
      $region32: #{tpu_custom_call.1} parent=27 // pred_fallthru
        _
    $region28: #{tpu_custom_call.1} parent=5 // pred_fallthru
      _
    %p1100 = scmp.le.s32.totalorder 2, %s8
    // Predicated region
    $region33: #{tpu_custom_call.1} parent=5 // pred_check
      %p1101 = pneg %p1100
    $region34: #{tpu_custom_call.1} parent=5 // pred_check_branch
      %1103 = sbr.rel (%p1101) target = $region36
    $region35: #{tpu_custom_call.1} parent=5 // pred_region
      %s1104 = ssub.s32 %s8, 2
      // Predicated region
      $region37: #{tpu_custom_call.1} parent=35 // pred_check
        %p1105 = pneg %p84
      $region38: #{tpu_custom_call.1} parent=35 // pred_check_branch
        %1107 = sbr.rel (%p1105) target = $region40
      $region39: #{tpu_custom_call.1} parent=35 // pred_region
        %p1108 = scmp.lt.s32.totalorder %s14, 1
        %s1109 = scalar_select %p1108, %s14, 1
        %s1110 = smul.addr %s1109, 4
        %s1111 = smul.addr %s1110, 8
        %s1112 = scalar_lea.vmem %s2, %s1111
      $region40: #{tpu_custom_call.1} parent=35 // pred_fallthru
        _
    $region36: #{tpu_custom_call.1} parent=5 // pred_fallthru
      _
  $region6: #{tpu_custom_call.1} parent=0 // loop_footer
    %s12 = sadd.s32 1, %s8
  $region7: #{tpu_custom_call.1} parent=0 // loop_footer_branch
    %7 = sbr.rel target = $region3
  $region8: #{tpu_custom_call.1} parent=0 // loop_exit
    _

</llo_original>
